<compile_context>
chip_gen: v6e
topology: v6e:2x2x1
jax: 0.10.0
libtpu: 0.0.40
codegen_flags: <defaults>
</compile_context>

<pallas_src>
import functools

import jax
import jax.numpy as jnp
from jax.experimental import pallas as pl
from jax.experimental.pallas import tpu as pltpu


def _round_up(x, m):
    return ((x + m - 1) // m) * m


def _tk_floor(e, min_tile_bytes):
    """Smallest K tile worth a separate pipeline step (bf16 W tile bytes)."""
    return max(128, _round_up(-(-(min_tile_bytes // 2) // e), 128))


def _pick_tk(d, e, *, max_tk=2048, min_steps=4, min_tile_bytes=256 * 1024):
    """Largest 128-multiple divisor of d giving ~>=min_steps grid steps while
    keeping the per-step W tile >= min_tile_bytes, capped at max_tk."""
    assert d % 128 == 0 and e % 128 == 0
    cap = max(_tk_floor(e, min_tile_bytes), (d // min_steps) // 128 * 128)
    cap = min(cap, max_tk, d)
    best = 128
    for cand in range(128, d + 1, 128):
        if cand <= cap and d % cand == 0:
            best = cand
    return best


def _choose_tiling(d_in, e, *, max_tk=2048, min_steps=4,
                   min_tile_bytes=256 * 1024):
    """Pick (tk, d_pad): K tile and padded D_in (a multiple of tk)."""
    d128 = _round_up(d_in, 128)
    tk = max(_tk_floor(e, min_tile_bytes), (d128 // min_steps) // 128 * 128)
    tk = min(tk, max_tk, d128)
    d_pad = _round_up(d128, tk)
    return tk, d_pad


def prepare_facenet_weights(w):
    """One-time (init-time) prep of the embedding matrix: cast to bf16 and
    zero-pad its K (row) dim so the kernel always gets an efficient K tile.

    Call this once when the loss module is built (like FaceIdLoss builds its
    facenet once) — NOT inside the per-step jitted loss path, so the per-call
    HBM traffic over W is exactly the 2 bytes/elem the kernel itself reads.
    """
    d_in, e = w.shape
    assert e % 128 == 0, "embedding dim must be lane-aligned"
    _, d_pad = _choose_tiling(d_in, e)
    w_bf = w.astype(jnp.bfloat16)
    if d_pad > d_in:
        w_bf = jnp.pad(w_bf, ((0, d_pad - d_in), (0, 0)))
    return w_bf


def _face_id_loss_kernel(gt_ref, pred_ref, w_ref, out_ref,
                         acc_g_ref, acc_p_ref, *, loss_weight, n_samples):
    """Grid axis 0 tiles the K (D_in) reduction of the embedding matmul.

    gt_ref   : (N, tk)  f32  -- real-image rows (cast to bf16 in-kernel).
    pred_ref : (N, tk)  f32  -- fake-image rows.
    w_ref    : (tk, E)  bf16 -- linear stand-in for the ArcFace backbone.
    acc_*    : (N, E)   f32  -- running embedding accumulators (VMEM scratch).
    out_ref  : (1, 1)   f32  -- scalar loss.
    """
    k = pl.program_id(0)

    @pl.when(k == 0)
    def _():
        acc_g_ref[...] = jnp.zeros_like(acc_g_ref)
        acc_p_ref[...] = jnp.zeros_like(acc_p_ref)

    w = w_ref[...]                                       # (tk, E) bf16
    # bf16 MXU matmuls with f32 accumulation; the f32->bf16 image cast is a
    # free VPU op in this HBM-bound kernel.
    acc_g_ref[...] += jnp.dot(gt_ref[...].astype(jnp.bfloat16), w,
                              preferred_element_type=jnp.float32)
    acc_p_ref[...] += jnp.dot(pred_ref[...].astype(jnp.bfloat16), w,
                              preferred_element_type=jnp.float32)

    @pl.when(k == pl.num_programs(0) - 1)
    def _():
        eg = acc_g_ref[...]                              # (N, E) gt embeddings
        ep = acc_p_ref[...]                              # (N, E) pred embeddings
        # Fused cosine: cos = <eg, ep> / sqrt((|eg|^2 + eps)(|ep|^2 + eps)).
        dot_gp = jnp.sum(eg * ep, axis=-1, keepdims=True)            # (N, 1)
        sq_g = jnp.sum(eg * eg, axis=-1, keepdims=True) + 1e-12
        sq_p = jnp.sum(ep * ep, axis=-1, keepdims=True) + 1e-12
        cos = dot_gp * jax.lax.rsqrt(sq_g * sq_p)
        loss = jnp.sum(1.0 - cos, axis=0, keepdims=True)             # (1, 1)
        out_ref[...] = loss * (loss_weight / n_samples)


def face_id_loss(gt, pred, w, *, loss_weight=1.0, tk=None, w_buffer_count=None):
    """gt, pred: (N, C, H, W) float images (NCHW).
    w: (D_pad, E) embedding matrix — ideally the bf16, K-padded output of
       prepare_facenet_weights(); D_pad may exceed C*H*W (zero rows).
    w_buffer_count: set to 3 if profiling shows exposed per-step W DMA waits.
    """
    n = gt.shape[0]
    assert pred.shape == gt.shape
    gt_f = gt.reshape(n, -1)
    pred_f = pred.reshape(n, -1)
    d_in = gt_f.shape[1]
    d_w, e = w.shape
    assert d_w >= d_in, "embedding weight K dim smaller than flattened image"
    assert d_w % 128 == 0 and e % 128 == 0, (
        "W must be lane-aligned; run it through prepare_facenet_weights()")

    if w.dtype != jnp.bfloat16:
        # Fallback only: prefer caching bf16 W at init (extra HBM pass here).
        w = w.astype(jnp.bfloat16)

    if d_w > d_in:
        # W's padded K rows are zero, so padding the image columns with zeros
        # leaves the embeddings unchanged.
        gt_f = jnp.pad(gt_f, ((0, 0), (0, d_w - d_in)))
        pred_f = jnp.pad(pred_f, ((0, 0), (0, d_w - d_in)))

    if tk is None:
        tk = _pick_tk(d_w, e)
    assert d_w % tk == 0 and tk % 128 == 0, "bad K tile"

    kernel = functools.partial(
        _face_id_loss_kernel, loss_weight=float(loss_weight), n_samples=n)

    # VMEM budget sized from the actual buffers + headroom (tight enough for
    # v7x's 64 MiB physical VMEM, explicit for v5e's 16 MiB scoped default).
    buf_mult = max(2, w_buffer_count or 2)
    n_sub = _round_up(max(n, 8), 8)                      # sublane padding (sizing only)
    img_tiles = 2 * 2 * (n_sub * tk * 4)                 # gt+pred, double-buffered, f32
    w_tiles = buf_mult * (tk * e * 2)                    # bf16 W tiles
    accs = 2 * (n_sub * e * 4)
    out_tile = 2 * (8 * 128 * 4)
    vmem_limit = int(img_tiles + w_tiles + accs + out_tile + (8 << 20))

    # Advisory cost: two (N, D) x (D, E) matmuls; f32 images + bf16 W streamed.
    cost = pl.CostEstimate(
        flops=2 * 2 * n * d_w * e,
        transcendentals=n,
        bytes_accessed=2 * n * d_w * 4 + d_w * e * 2 + 4)

    w_spec_kwargs = {}
    if w_buffer_count is not None and w_buffer_count > 2:
        w_spec_kwargs["pipeline_mode"] = pl.Buffered(w_buffer_count)

    out = pl.pallas_call(
        kernel,
        out_shape=jax.ShapeDtypeStruct((1, 1), jnp.float32),
        grid_spec=pltpu.PrefetchScalarGridSpec(
            num_scalar_prefetch=0,
            grid=(d_w // tk,),
            in_specs=[
                pl.BlockSpec((n, tk), lambda k: (0, k)),   # gt rows
                pl.BlockSpec((n, tk), lambda k: (0, k)),   # pred rows
                pl.BlockSpec((tk, e), lambda k: (k, 0),    # W stream
                             **w_spec_kwargs),
            ],
            out_specs=pl.BlockSpec((1, 1), lambda k: (0, 0)),
            scratch_shapes=[
                pltpu.VMEM((n, e), jnp.float32),           # gt embedding acc
                pltpu.VMEM((n, e), jnp.float32),           # pred embedding acc
            ],
        ),
        compiler_params=pltpu.CompilerParams(
            dimension_semantics=("arbitrary",),
            vmem_limit_bytes=vmem_limit),
        cost_estimate=cost,
    )(gt_f, pred_f, w)
    return out[0, 0]   # 0-dim scalar, like the PyTorch module's output


def _reference(gt, pred, w, loss_weight, stream_dtype=jnp.float32):
    """Pure-JAX reference; stream_dtype mimics the kernel's bf16 streaming."""
    n = gt.shape[0]
    gt_f = gt.reshape(n, -1).astype(stream_dtype)
    pred_f = pred.reshape(n, -1).astype(stream_dtype)
    w_c = w.astype(stream_dtype)
    eg = jnp.dot(gt_f, w_c, preferred_element_type=jnp.float32)
    ep = jnp.dot(pred_f, w_c, preferred_element_type=jnp.float32)
    cos = jnp.sum(eg * ep, axis=-1) / jnp.sqrt(
        (jnp.sum(eg * eg, axis=-1) + 1e-12) *
        (jnp.sum(ep * ep, axis=-1) + 1e-12))
    return loss_weight * jnp.mean(1.0 - cos)


if __name__ == "__main__":
    key = jax.random.PRNGKey(0)
    k_gt, k_pred, k_w = jax.random.split(key, 3)

    # Small synthetic face images: N=2, C=3, H=W=16 (NCHW).
    N, C, H, W = 2, 3, 16, 16
    E = 512                       # ArcFace embedding dim (lane-aligned)
    D_in = C * H * W              # 768

    gt_imgs = jax.random.uniform(k_gt, (N, C, H, W), jnp.float32,
                                 minval=-1.0, maxval=1.0)
    fake_imgs = jax.random.uniform(k_pred, (N, C, H, W), jnp.float32,
                                   minval=-1.0, maxval=1.0)
    # Deterministic synthetic "facenet" weights.
    w_embed = jax.random.normal(k_w, (D_in, E), jnp.float32) / jnp.sqrt(D_in)

    loss_weight = 1.0

    # One-time init-style prep (bf16 cast + K padding), kept out of the
    # per-call loss path — mirrors FaceIdLoss building its facenet once.
    w_prepped = prepare_facenet_weights(w_embed)

    # Default path: auto-picked K tile (256 here -> 3 pipelined grid steps).
    loss = face_id_loss(gt_imgs, fake_imgs, w_prepped, loss_weight=loss_weight)
    loss = jax.block_until_ready(loss)

    # Also exercise a finer-grained K-reduction explicitly.
    loss_tiled = face_id_loss(gt_imgs, fake_imgs, w_prepped,
                              loss_weight=loss_weight, tk=128)
    loss_tiled = jax.block_until_ready(loss_tiled)

    ref_bf16 = _reference(gt_imgs, fake_imgs, w_embed, loss_weight,
                          stream_dtype=jnp.bfloat16)
    ref_f32 = _reference(gt_imgs, fake_imgs, w_embed, loss_weight,
                         stream_dtype=jnp.float32)

    # Tight check against a bf16-streaming-consistent reference.
    assert jnp.allclose(loss, ref_bf16, atol=1e-4, rtol=1e-4), (loss, ref_bf16)
    assert jnp.allclose(loss_tiled, ref_bf16, atol=1e-4, rtol=1e-4), (
        loss_tiled, ref_bf16)
    # Loose check against the full-f32 reference (bf16 quantization of inputs).
    assert jnp.allclose(loss, ref_f32, atol=5e-2, rtol=5e-2), (loss, ref_f32)

    print("KERNEL_OK")
</pallas_src>

<mosaic_0001>
module attributes {stable_mosaic.version = 11 : i64} {
  func.func @_face_id_loss_kernel(%arg0: i32, %arg1: memref<2x256xf32, #tpu.memory_space<vmem>>, %arg2: memref<2x256xf32, #tpu.memory_space<vmem>>, %arg3: memref<256x512xbf16, #tpu.memory_space<vmem>>, %arg4: memref<1x1xf32, #tpu.memory_space<vmem>>, %arg5: memref<2x512xf32, #tpu.memory_space<vmem>>, %arg6: memref<2x512xf32, #tpu.memory_space<vmem>>) attributes {dimension_semantics = [#tpu.dimension_semantics<arbitrary>], iteration_bounds = array<i64: 3>, scalar_prefetch = 0 : i64, scratch_operands = 2 : i64, tpu.core_type = #tpu.core_type<tc>, window_params = [{transform_indices = @transform_0, window_bounds = array<i64: 2, 256>}, {transform_indices = @transform_1, window_bounds = array<i64: 2, 256>}, {transform_indices = @transform_2, window_bounds = array<i64: 256, 512>}, {pipeline_mode = #tpu.pipeline_mode<synchronous>, transform_indices = @transform_3, window_bounds = array<i64: 1, 1>}]} {
    %c0_i32 = arith.constant 0 : i32
    %0 = arith.cmpi eq, %arg0, %c0_i32 : i32
    %1 = arith.extui %0 : i1 to i32
    %c0_i32_0 = arith.constant 0 : i32
    %2 = arith.cmpi ne, %1, %c0_i32_0 : i32
    scf.if %2 {
      %cst_16 = arith.constant 0.000000e+00 : f32
      %19 = vector.broadcast %cst_16 : f32 to vector<2x512xf32>
      %c0_17 = arith.constant 0 : index
      %c0_18 = arith.constant 0 : index
      %20 = vector.load %arg5[%c0_17, %c0_18] : memref<2x512xf32, #tpu.memory_space<vmem>>, vector<2x512xf32>
      tpu.vector_store %arg5[%c0_17, %c0_18], %19 {strides = array<i32>} : memref<2x512xf32, #tpu.memory_space<vmem>>, vector<2x512xf32>,
      %cst_19 = arith.constant 0.000000e+00 : f32
      %21 = vector.broadcast %cst_19 : f32 to vector<2x512xf32>
      %c0_20 = arith.constant 0 : index
      %c0_21 = arith.constant 0 : index
      %22 = vector.load %arg6[%c0_20, %c0_21] : memref<2x512xf32, #tpu.memory_space<vmem>>, vector<2x512xf32>
      tpu.vector_store %arg6[%c0_20, %c0_21], %21 {strides = array<i32>} : memref<2x512xf32, #tpu.memory_space<vmem>>, vector<2x512xf32>,
    } else {
    }
    %c0 = arith.constant 0 : index
    %c0_1 = arith.constant 0 : index
    %3 = vector.load %arg3[%c0, %c0_1] : memref<256x512xbf16, #tpu.memory_space<vmem>>, vector<256x512xbf16>
    %c0_2 = arith.constant 0 : index
    %c0_3 = arith.constant 0 : index
    %4 = vector.load %arg5[%c0_2, %c0_3] : memref<2x512xf32, #tpu.memory_space<vmem>>, vector<2x512xf32>
    %c0_4 = arith.constant 0 : index
    %c0_5 = arith.constant 0 : index
    %5 = vector.load %arg1[%c0_4, %c0_5] : memref<2x256xf32, #tpu.memory_space<vmem>>, vector<2x256xf32>
    %6 = arith.truncf %5 : vector<2x256xf32> to vector<2x256xbf16>
    %cst = arith.constant dense<0.000000e+00> : vector<2x512xf32>
    %7 = tpu.matmul %6, %3, %cst {dimension_numbers = #tpu.dot_dimension_numbers<[1], [0], [0], [1], [0, 0, 1, 1], [], []>} : vector<2x256xbf16>, vector<256x512xbf16>, vector<2x512xf32> -> vector<2x512xf32>
    %8 = arith.addf %4, %7 : vector<2x512xf32>
    %c0_6 = arith.constant 0 : index
    %c0_7 = arith.constant 0 : index
    %9 = vector.load %arg5[%c0_6, %c0_7] : memref<2x512xf32, #tpu.memory_space<vmem>>, vector<2x512xf32>
    tpu.vector_store %arg5[%c0_6, %c0_7], %8 {strides = array<i32>} : memref<2x512xf32, #tpu.memory_space<vmem>>, vector<2x512xf32>,
    %c0_8 = arith.constant 0 : index
    %c0_9 = arith.constant 0 : index
    %10 = vector.load %arg6[%c0_8, %c0_9] : memref<2x512xf32, #tpu.memory_space<vmem>>, vector<2x512xf32>
    %c0_10 = arith.constant 0 : index
    %c0_11 = arith.constant 0 : index
    %11 = vector.load %arg2[%c0_10, %c0_11] : memref<2x256xf32, #tpu.memory_space<vmem>>, vector<2x256xf32>
    %12 = arith.truncf %11 : vector<2x256xf32> to vector<2x256xbf16>
    %cst_12 = arith.constant dense<0.000000e+00> : vector<2x512xf32>
    %13 = tpu.matmul %12, %3, %cst_12 {dimension_numbers = #tpu.dot_dimension_numbers<[1], [0], [0], [1], [0, 0, 1, 1], [], []>} : vector<2x256xbf16>, vector<256x512xbf16>, vector<2x512xf32> -> vector<2x512xf32>
    %14 = arith.addf %10, %13 : vector<2x512xf32>
    %c0_13 = arith.constant 0 : index
    %c0_14 = arith.constant 0 : index
    %15 = vector.load %arg6[%c0_13, %c0_14] : memref<2x512xf32, #tpu.memory_space<vmem>>, vector<2x512xf32>
    tpu.vector_store %arg6[%c0_13, %c0_14], %14 {strides = array<i32>} : memref<2x512xf32, #tpu.memory_space<vmem>>, vector<2x512xf32>,
    %c2_i32 = arith.constant 2 : i32
    %16 = arith.cmpi eq, %arg0, %c2_i32 : i32
    %17 = arith.extui %16 : i1 to i32
    %c0_i32_15 = arith.constant 0 : i32
    %18 = arith.cmpi ne, %17, %c0_i32_15 : i32
    scf.if %18 {
      %c0_16 = arith.constant 0 : index
      %c0_17 = arith.constant 0 : index
      %19 = vector.load %arg5[%c0_16, %c0_17] : memref<2x512xf32, #tpu.memory_space<vmem>>, vector<2x512xf32>
      %c0_18 = arith.constant 0 : index
      %c0_19 = arith.constant 0 : index
      %20 = vector.load %arg6[%c0_18, %c0_19] : memref<2x512xf32, #tpu.memory_space<vmem>>, vector<2x512xf32>
      %21 = arith.mulf %19, %20 : vector<2x512xf32>
      %cst_20 = arith.constant dense<0.000000e+00> : vector<2xf32>
      %22 = vector.multi_reduction <add>, %21, %cst_20 [1] : vector<2x512xf32> to vector<2xf32>
      %23 = vector.shape_cast %22 : vector<2xf32> to vector<2x1xf32>
      %24 = arith.mulf %19, %19 : vector<2x512xf32>
      %cst_21 = arith.constant dense<0.000000e+00> : vector<2xf32>
      %25 = vector.multi_reduction <add>, %24, %cst_21 [1] : vector<2x512xf32> to vector<2xf32>
      %26 = vector.shape_cast %25 : vector<2xf32> to vector<2x1xf32>
      %cst_22 = arith.constant 9.99999996E-13 : f32
      %27 = vector.broadcast %cst_22 : f32 to vector<2x1xf32>
      %28 = arith.addf %26, %27 : vector<2x1xf32>
      %29 = arith.mulf %20, %20 : vector<2x512xf32>
      %cst_23 = arith.constant dense<0.000000e+00> : vector<2xf32>
      %30 = vector.multi_reduction <add>, %29, %cst_23 [1] : vector<2x512xf32> to vector<2xf32>
      %31 = vector.shape_cast %30 : vector<2xf32> to vector<2x1xf32>
      %cst_24 = arith.constant 9.99999996E-13 : f32
      %32 = vector.broadcast %cst_24 : f32 to vector<2x1xf32>
      %33 = arith.addf %31, %32 : vector<2x1xf32>
      %34 = arith.mulf %28, %33 : vector<2x1xf32>
      %35 = math.rsqrt %34 : vector<2x1xf32>
      %36 = arith.mulf %23, %35 : vector<2x1xf32>
      %cst_25 = arith.constant 1.000000e+00 : f32
      %37 = vector.broadcast %cst_25 : f32 to vector<2x1xf32>
      %38 = arith.subf %37, %36 : vector<2x1xf32>
      %cst_26 = arith.constant dense<0.000000e+00> : vector<1xf32>
      %39 = vector.multi_reduction <add>, %38, %cst_26 [0] : vector<2x1xf32> to vector<1xf32>
      %40 = vector.shape_cast %39 : vector<1xf32> to vector<1x1xf32>
      %cst_27 = arith.constant 5.000000e-01 : f32
      %41 = vector.broadcast %cst_27 : f32 to vector<1x1xf32>
      %42 = arith.mulf %40, %41 : vector<1x1xf32>
      %c0_28 = arith.constant 0 : index
      %c0_29 = arith.constant 0 : index
      %43 = vector.load %arg4[%c0_28, %c0_29] : memref<1x1xf32, #tpu.memory_space<vmem>>, vector<1x1xf32>
      tpu.vector_store %arg4[%c0_28, %c0_29], %42 {strides = array<i32>} : memref<1x1xf32, #tpu.memory_space<vmem>>, vector<1x1xf32>,
    } else {
    }
    return
  }
  func.func @transform_0(%arg0: i32) -> (i32, i32) {
    %c0_i32 = arith.constant 0 : i32
    %c0_i32_0 = arith.constant 0 : i32
    return %c0_i32, %arg0 : i32, i32
  }
  func.func @transform_1(%arg0: i32) -> (i32, i32) {
    %c0_i32 = arith.constant 0 : i32
    %c0_i32_0 = arith.constant 0 : i32
    return %c0_i32, %arg0 : i32, i32
  }
  func.func @transform_2(%arg0: i32) -> (i32, i32) {
    %c0_i32 = arith.constant 0 : i32
    %c0_i32_0 = arith.constant 0 : i32
    return %arg0, %c0_i32 : i32, i32
  }
  func.func @transform_3(%arg0: i32) -> (i32, i32) {
    %c0_i32 = arith.constant 0 : i32
    %c0_i32_0 = arith.constant 0 : i32
    %c0_i32_1 = arith.constant 0 : i32
    return %c0_i32, %c0_i32_0 : i32, i32
  }
}

</mosaic_0001>

<llo_original>
// kernel: tpu_custom_call.1
$region0: #{tpu_custom_call.1}
  #allocation0 [shape = 'u32[]', space=smem, size = 0x4, offset = 0x4, fixed_abs, tag = 'smem constant byte address 0x4 - core index']
  #allocation1 [shape = 'u32[144,128]{1,0:T(1,128)}', space=vmem, size = 0x12000, scoped, tag = 'internal scratch']
  #allocation2 [shape = 'f32[2,512]{1,0:T(2,128)}', space=vmem, size = 0x1000, scoped, tag = 'scratch operand']
  #allocation3 [shape = 'f32[2,512]{1,0:T(2,128)}', space=vmem, size = 0x1000, scoped, tag = 'scratch operand']
  %s0 = inlined_call_operand.hbm [shape: f32[2,768], index: 0, kind: input, shape index: {}]
  %s1 = inlined_call_operand.hbm [shape: f32[2,768], index: 1, kind: input, shape index: {}]
  %s2 = inlined_call_operand.hbm [shape: bf16[768,512], index: 2, kind: input, shape index: {}]
  %s3 = inlined_call_operand.hbm [shape: f32[1,1], index: 3, kind: output, shape index: {}]
  %s4 = sld [smem:[#allocation0]]
  $region65: #{tpu_custom_call.1} parent=0
    _
  %s6 = ssub.s32 1, %s4
  %s7 = scalar_select 0, %s6, %s4
  $region1: #{tpu_custom_call.1} parent=0
    #allocation4 [shape = 'u8[4096]{0}', space=vmem, size = 0x1000, scoped, tag = 'input window, operand 0']
    #allocation5 [shape = 's32[2]{0}', space=sflag, size = 0x8, scoped, tag = 'scoped memory for tpu_custom_call.1']
    #allocation6 [shape = 's32[2]{0}', space=sflag, size = 0x8, scoped, tag = 'scoped memory for tpu_custom_call.1']
    #allocation7 [shape = 'u8[4096]{0}', space=vmem, size = 0x1000, scoped, tag = 'input window, operand 1']
    #allocation8 [shape = 's32[2]{0}', space=sflag, size = 0x8, scoped, tag = 'scoped memory for tpu_custom_call.1']
    #allocation9 [shape = 'u8[524288]{0}', space=vmem, size = 0x80000, scoped, tag = 'input window, operand 2']
    #allocation10 [shape = 'u8[512]{0}', space=vmem, size = 0x400, scoped, tag = 'output window, operand 0, single buffered']
    %8 = vsyncpa [#allocation5], 0
    %s9 = scalar_lea.sflag [#allocation5], 1
    %10 = vsyncpa %s9, 0
    %11 = vsyncpa [#allocation8], 0
    %s12 = scalar_lea.sflag [#allocation8], 1
    %13 = vsyncpa %s12, 0
    %14 = vsyncpa [#allocation6], 0
    loop: start=0, step=1, limit=5
    $region2: #{tpu_custom_call.1} parent=1 // loop_pre_header
      _
    $region3: #{tpu_custom_call.1} parent=1 // loop_header
      %s16 = sphi 0, %s20
      %p17 = scmp.ge.s32.totalorder %s16, 5
      %s26 = sphi 0, %s28
      %s29 = sphi 0, %s26
      %s30 = sphi 0, %s29
      %s46 = sphi 0, %s30
      %s52 = sphi 0, %s54
      %s55 = sphi 0, %s52
      %s56 = sphi 0, %s55
      %s72 = sphi 0, %s56
      %s78 = sphi 0, %s80
      %s81 = sphi 0, %s78
      %s82 = sphi 0, %s81
      %s98 = sphi 0, %s82
      %s102 = sphi 0, %s102
      %s104 = sphi 0, %s102
      %s105 = sphi 0, %s104
      %s119 = sphi 0, %s105
    $region4: #{tpu_custom_call.1} parent=1 // loop_header_branch
      %19 = sbr.rel (%p17) target = $region8
    $region5: #{tpu_custom_call.1} parent=1 // loop_body
      %s21 = ssub.s32 %s16, 1
      %s22 = ssub.s32 %s16, 2
      %s23 = sadd.s32 %s16, 1
      %s24 = ssub.s32 %s16, %s23
      %p25 = scmp.eq.s32.totalorder %s24, 0
      %s27 = sadd.s32 %s26, 1
      %s28 = scalar_select %p25, %s26, %s27
      %p31 = pneg %p25
      %p32 = scmp.eq.s32.totalorder %s16, 2
      %p33 = por %p31, %p32
      %p34 = scmp.ne.s32.totalorder %s26, %s29
      %p35 = scmp.eq.s32.totalorder %s16, 0
      %p36 = por %p34, %p35
      %p37 = scmp.ne.s32.totalorder %s26, %s29
      %p38 = scmp.eq.s32.totalorder %s21, 2
      %p39 = por %p37, %p38
      %p40 = scmp.ne.s32.totalorder %s29, %s30
      %p41 = scmp.eq.s32.totalorder %s21, 0
      %p42 = por %p40, %p41
      %p43 = scmp.ne.s32.totalorder %s29, %s30
      %p44 = scmp.eq.s32.totalorder %s22, 2
      %p45 = por %p43, %p44
      %p47 = scmp.ne.s32.totalorder %s30, %s46
      %p48 = scmp.eq.s32.totalorder %s22, 0
      %p49 = por %p47, %p48
      %s50 = ssub.s32 %s16, %s23
      %p51 = scmp.eq.s32.totalorder %s50, 0
      %s53 = sadd.s32 %s52, 1
      %s54 = scalar_select %p51, %s52, %s53
      %p57 = pneg %p51
      %p58 = scmp.eq.s32.totalorder %s16, 2
      %p59 = por %p57, %p58
      %p60 = scmp.ne.s32.totalorder %s52, %s55
      %p61 = scmp.eq.s32.totalorder %s16, 0
      %p62 = por %p60, %p61
      %p63 = scmp.ne.s32.totalorder %s52, %s55
      %p64 = scmp.eq.s32.totalorder %s21, 2
      %p65 = por %p63, %p64
      %p66 = scmp.ne.s32.totalorder %s55, %s56
      %p67 = scmp.eq.s32.totalorder %s21, 0
      %p68 = por %p66, %p67
      %p69 = scmp.ne.s32.totalorder %s55, %s56
      %p70 = scmp.eq.s32.totalorder %s22, 2
      %p71 = por %p69, %p70
      %p73 = scmp.ne.s32.totalorder %s56, %s72
      %p74 = scmp.eq.s32.totalorder %s22, 0
      %p75 = por %p73, %p74
      %s76 = ssub.s32 %s16, %s23
      %p77 = scmp.eq.s32.totalorder %s76, 0
      %s79 = sadd.s32 %s78, 1
      %s80 = scalar_select %p77, %s78, %s79
      %p83 = pneg %p77
      %p84 = scmp.eq.s32.totalorder %s16, 2
      %p85 = por %p83, %p84
      %p86 = scmp.ne.s32.totalorder %s78, %s81
      %p87 = scmp.eq.s32.totalorder %s16, 0
      %p88 = por %p86, %p87
      %p89 = scmp.ne.s32.totalorder %s78, %s81
      %p90 = scmp.eq.s32.totalorder %s21, 2
      %p91 = por %p89, %p90
      %p92 = scmp.ne.s32.totalorder %s81, %s82
      %p93 = scmp.eq.s32.totalorder %s21, 0
      %p94 = por %p92, %p93
      %p95 = scmp.ne.s32.totalorder %s81, %s82
      %p96 = scmp.eq.s32.totalorder %s22, 2
      %p97 = por %p95, %p96
      %p99 = scmp.ne.s32.totalorder %s82, %s98
      %p100 = scmp.eq.s32.totalorder %s22, 0
      %p101 = por %p99, %p100
      %s103 = sadd.s32 %s102, 1
      %p106 = scmp.eq.s32.totalorder %s16, 2
      %p107 = scmp.ne.s32.totalorder %s102, %s104
      %p108 = scmp.eq.s32.totalorder %s16, 0
      %p109 = por %p107, %p108
      %p110 = scmp.ne.s32.totalorder %s102, %s104
      %p111 = scmp.eq.s32.totalorder %s21, 2
      %p112 = por %p110, %p111
      %p113 = scmp.ne.s32.totalorder %s104, %s105
      %p114 = scmp.eq.s32.totalorder %s21, 0
      %p115 = por %p113, %p114
      %p116 = scmp.ne.s32.totalorder %s104, %s105
      %p117 = scmp.eq.s32.totalorder %s22, 2
      %p118 = por %p116, %p117
      %p120 = scmp.ne.s32.totalorder %s105, %s119
      %p121 = scmp.eq.s32.totalorder %s22, 0
      %p122 = por %p120, %p121
      %p123 = scmp.le.s32.totalorder 1, %s16
      %p124 = scmp.lt.s32.totalorder %s16, 4
      %p125 = pnand %p123, %p124
      %p126 = pneg %p125
      // Predicated region
      $region9: #{tpu_custom_call.1} parent=5 // pred_check
        _
      $region10: #{tpu_custom_call.1} parent=5 // pred_check_branch
        %128 = sbr.rel (%p125) target = $region12
      $region11: #{tpu_custom_call.1} parent=5 // pred_region
        %s129 = ssub.s32 %s16, 1
      $region12: #{tpu_custom_call.1} parent=5 // pred_fallthru
        _
      %p130 = scmp.lt.s32.totalorder %s16, 3
      // Predicated region
      $region13: #{tpu_custom_call.1} parent=5 // pred_check
        %p131 = pneg %p130
      $region14: #{tpu_custom_call.1} parent=5 // pred_check_branch
        %133 = sbr.rel (%p131) target = $region16
      $region15: #{tpu_custom_call.1} parent=5 // pred_region
        // Predicated region
        $region17: #{tpu_custom_call.1} parent=15 // pred_check
          %p134 = pneg %p36
        $region18: #{tpu_custom_call.1} parent=15 // pred_check_branch
          %136 = sbr.rel (%p134) target = $region20
        $region19: #{tpu_custom_call.1} parent=15 // pred_region
          %s137 = sand.u32 %s26, 1
          %s138 = scalar_lea.sflag [#allocation5], %s137
          %s139 = sand.u32 %s26, 1
          %s140 = smul.addr %s139, 4
          %s141 = scalar_lea.vmem [#allocation4], %s140
          %s142 = smul.u32 2, %s16
          %s144 = ssub.s32 64, 64
          %145 = vsyncadd %s138, %s144
          %s146 = smul.addr %s142, 32
          %s147 = scalar_lea.hbm %s0, %s146
          %s149 = sshll.u32 %s141, 4
          %s150 = int_to_ptr.vmem [resolvable:$true] %s149
          %152 = dma.hbm_to_vmem [thread:$0]  %s147, 64, %s150, %s138
        $region20: #{tpu_custom_call.1} parent=15 // pred_fallthru
          _
        // Predicated region
        $region21: #{tpu_custom_call.1} parent=15 // pred_check
          %p153 = pneg %p62
        $region22: #{tpu_custom_call.1} parent=15 // pred_check_branch
          %155 = sbr.rel (%p153) target = $region24
        $region23: #{tpu_custom_call.1} parent=15 // pred_region
          %s156 = sand.u32 %s16, 1
          %s157 = scalar_lea.sflag [#allocation8], %s156
          %s158 = sand.u32 %s52, 1
          %s159 = smul.addr %s158, 4
          %s160 = scalar_lea.vmem [#allocation7], %s159
          %s161 = smul.u32 2, %s16
          %s163 = ssub.s32 64, 64
          %164 = vsyncadd %s157, %s163
          %s165 = smul.addr %s161, 32
          %s166 = scalar_lea.hbm %s1, %s165
          %s168 = sshll.u32 %s160, 4
          %s169 = int_to_ptr.vmem [resolvable:$true] %s168
          %171 = dma.hbm_to_vmem [thread:$0]  %s166, 64, %s169, %s157
        $region24: #{tpu_custom_call.1} parent=15 // pred_fallthru
          _
        // Predicated region
        $region25: #{tpu_custom_call.1} parent=15 // pred_check
          %p172 = pneg %p88
        $region26: #{tpu_custom_call.1} parent=15 // pred_check_branch
          %174 = sbr.rel (%p172) target = $region28
        $region27: #{tpu_custom_call.1} parent=15 // pred_region
          %s175 = sand.u32 %s16, 1
          %s176 = scalar_lea.sflag [#allocation8], %s175
          %s177 = sand.u32 %s78, 1
          %s178 = smul.addr %s177, 512
          %s179 = scalar_lea.vmem [#allocation9], %s178
          %s180 = smul.u32 32, %s16
          %s182 = ssub.s32 8192, 8192
          %183 = vsyncadd %s176, %s182
          %s184 = smul.addr %s180, 4
          %s185 = smul.addr %s184, 64
          %s186 = scalar_lea.hbm %s2, %s185
          %s187 = sshll.u32 %s179, 4
          %s188 = int_to_ptr.vmem [resolvable:$true] %s187
          %193 = dma.hbm_to_vmem [thread:$0]  %s186, 8192, %s188, %s176, 256, 256, 16
        $region28: #{tpu_custom_call.1} parent=15 // pred_fallthru
          _
      $region16: #{tpu_custom_call.1} parent=5 // pred_fallthru
        _
      %p194 = scmp.le.s32.totalorder 1, %s16
      %p195 = scmp.lt.s32.totalorder %s16, 4
      %p196 = pnand %p194, %p195
      %p197 = pneg %p196
      // Predicated region
      $region29: #{tpu_custom_call.1} parent=5 // pred_check
        _
      $region30: #{tpu_custom_call.1} parent=5 // pred_check_branch
        %199 = sbr.rel (%p196) target = $region32
      $region31: #{tpu_custom_call.1} parent=5 // pred_region
        %s200 = ssub.s32 %s16, 1
        %s201 = sand.u32 %s29, 1
        %s202 = scalar_lea.sflag [#allocation5], %s201
        %s203 = sand.u32 %s29, 1
        %s204 = smul.addr %s203, 4
        %s205 = scalar_lea.vmem [#allocation4], %s204
        // Predicated region
        $region33: #{tpu_custom_call.1} parent=31 // pred_check
          %p206 = pneg %p42
        $region34: #{tpu_custom_call.1} parent=31 // pred_check_branch
          %208 = sbr.rel (%p206) target = $region36
        $region35: #{tpu_custom_call.1} parent=31 // pred_region
          %209 = dma.done %s202, 64
        $region36: #{tpu_custom_call.1} parent=31 // pred_fallthru
          _
        %s210 = sand.u32 %s21, 1
        %s211 = scalar_lea.sflag [#allocation8], %s210
        %s212 = sand.u32 %s55, 1
        %s213 = smul.addr %s212, 4
        %s214 = scalar_lea.vmem [#allocation7], %s213
        // Predicated region
        $region37: #{tpu_custom_call.1} parent=31 // pred_check
          %p215 = pneg %p68
        $region38: #{tpu_custom_call.1} parent=31 // pred_check_branch
          %217 = sbr.rel (%p215) target = $region40
        $region39: #{tpu_custom_call.1} parent=31 // pred_region
          %218 = dma.done %s211, 64
        $region40: #{tpu_custom_call.1} parent=31 // pred_fallthru
          _
        %s219 = sand.u32 %s21, 1
        %s220 = scalar_lea.sflag [#allocation8], %s219
        %s221 = sand.u32 %s81, 1
        %s222 = smul.addr %s221, 512
        %s223 = scalar_lea.vmem [#allocation9], %s222
        // Predicated region
        $region41: #{tpu_custom_call.1} parent=31 // pred_check
          %p224 = pneg %p94
        $region42: #{tpu_custom_call.1} parent=31 // pred_check_branch
          %226 = sbr.rel (%p224) target = $region44
        $region43: #{tpu_custom_call.1} parent=31 // pred_region
          %227 = dma.done %s220, 8192
        $region44: #{tpu_custom_call.1} parent=31 // pred_fallthru
          _
        %s228 = sand.u32 %s29, 1
        %s229 = scalar_lea.sflag [#allocation5], %s228
        %s230 = sand.u32 %s29, 1
        %s231 = smul.addr %s230, 4
        %s232 = scalar_lea.vmem [#allocation4], %s231
        %p233 = pneg %p42
        %p234 = pneg %p39
        %s235 = sand.u32 %s21, 1
        %s236 = scalar_lea.sflag [#allocation8], %s235
        %s237 = sand.u32 %s55, 1
        %s238 = smul.addr %s237, 4
        %s239 = scalar_lea.vmem [#allocation7], %s238
        %p240 = pneg %p68
        %p241 = pneg %p65
        %s242 = sand.u32 %s21, 1
        %s243 = scalar_lea.sflag [#allocation8], %s242
        %s244 = sand.u32 %s81, 1
        %s245 = smul.addr %s244, 512
        %s246 = scalar_lea.vmem [#allocation9], %s245
        %p247 = pneg %p94
        %p248 = pneg %p91
        %p249 = pneg %p115
        %p250 = pneg %p112
        %s251 = smul.u32 2, %s21
        %s252 = smul.u32 2, %s21
        %s253 = smul.u32 32, %s21
        %p254 = scmp.eq.s32.totalorder %s21, 0
        // Predicated region
        $region45: #{tpu_custom_call.1} parent=31 // pred_check
          %p255 = pneg %p254
        $region46: #{tpu_custom_call.1} parent=31 // pred_check_branch
          %257 = sbr.rel (%p255) target = $region48
        $region47: #{tpu_custom_call.1} parent=31 // pred_region
          %258 = vst [vmem:[#allocation2] sm:$0xff] 0.0
          %259 = vst [vmem:[#allocation3] sm:$0xff] 0.0
        $region48: #{tpu_custom_call.1} parent=31 // pred_fallthru
          _
        %v260 = vld [vmem:[%s223] sm:$0xff]
        %v261 = vld [vmem:[%s223 + $0x8] sm:$0xff]
        %v262 = vld [vmem:[%s223 + $0x10] sm:$0xff]
        %v263 = vld [vmem:[%s223 + $0x18] sm:$0xff]
        %v264 = vld [vmem:[%s223 + $0x20] sm:$0xff]
        %v265 = vld [vmem:[%s223 + $0x28] sm:$0xff]
        %v266 = vld [vmem:[%s223 + $0x30] sm:$0xff]
        %v267 = vld [vmem:[%s223 + $0x38] sm:$0xff]
        %v268 = vld [vmem:[%s223 + $0x40] sm:$0xff]
        %v269 = vld [vmem:[%s223 + $0x48] sm:$0xff]
        %v270 = vld [vmem:[%s223 + $0x50] sm:$0xff]
        %v271 = vld [vmem:[%s223 + $0x58] sm:$0xff]
        %v272 = vld [vmem:[%s223 + $0x60] sm:$0xff]
        %v273 = vld [vmem:[%s223 + $0x68] sm:$0xff]
        %v274 = vld [vmem:[%s223 + $0x70] sm:$0xff]
        %v275 = vld [vmem:[%s223 + $0x78] sm:$0xff]
        %v276 = vld [vmem:[%s223 + $0x80] sm:$0xff]
        %v277 = vld [vmem:[%s223 + $0x88] sm:$0xff]
        %v278 = vld [vmem:[%s223 + $0x90] sm:$0xff]
        %v279 = vld [vmem:[%s223 + $0x98] sm:$0xff]
        %v280 = vld [vmem:[%s223 + $0xa0] sm:$0xff]
        %v281 = vld [vmem:[%s223 + $0xa8] sm:$0xff]
        %v282 = vld [vmem:[%s223 + $0xb0] sm:$0xff]
        %v283 = vld [vmem:[%s223 + $0xb8] sm:$0xff]
        %v284 = vld [vmem:[%s223 + $0xc0] sm:$0xff]
        %v285 = vld [vmem:[%s223 + $0xc8] sm:$0xff]
        %v286 = vld [vmem:[%s223 + $0xd0] sm:$0xff]
        %v287 = vld [vmem:[%s223 + $0xd8] sm:$0xff]
        %v288 = vld [vmem:[%s223 + $0xe0] sm:$0xff]
        %v289 = vld [vmem:[%s223 + $0xe8] sm:$0xff]
        %v290 = vld [vmem:[%s223 + $0xf0] sm:$0xff]
        %v291 = vld [vmem:[%s223 + $0xf8] sm:$0xff]
        %v292 = vld [vmem:[%s223 + $0x100] sm:$0xff]
        %v293 = vld [vmem:[%s223 + $0x108] sm:$0xff]
        %v294 = vld [vmem:[%s223 + $0x110] sm:$0xff]
        %v295 = vld [vmem:[%s223 + $0x118] sm:$0xff]
        %v296 = vld [vmem:[%s223 + $0x120] sm:$0xff]
        %v297 = vld [vmem:[%s223 + $0x128] sm:$0xff]
        %v298 = vld [vmem:[%s223 + $0x130] sm:$0xff]
        %v299 = vld [vmem:[%s223 + $0x138] sm:$0xff]
        %v300 = vld [vmem:[%s223 + $0x140] sm:$0xff]
        %v301 = vld [vmem:[%s223 + $0x148] sm:$0xff]
        %v302 = vld [vmem:[%s223 + $0x150] sm:$0xff]
        %v303 = vld [vmem:[%s223 + $0x158] sm:$0xff]
        %v304 = vld [vmem:[%s223 + $0x160] sm:$0xff]
        %v305 = vld [vmem:[%s223 + $0x168] sm:$0xff]
        %v306 = vld [vmem:[%s223 + $0x170] sm:$0xff]
        %v307 = vld [vmem:[%s223 + $0x178] sm:$0xff]
        %v308 = vld [vmem:[%s223 + $0x180] sm:$0xff]
        %v309 = vld [vmem:[%s223 + $0x188] sm:$0xff]
        %v310 = vld [vmem:[%s223 + $0x190] sm:$0xff]
        %v311 = vld [vmem:[%s223 + $0x198] sm:$0xff]
        %v312 = vld [vmem:[%s223 + $0x1a0] sm:$0xff]
        %v313 = vld [vmem:[%s223 + $0x1a8] sm:$0xff]
        %v314 = vld [vmem:[%s223 + $0x1b0] sm:$0xff]
        %v315 = vld [vmem:[%s223 + $0x1b8] sm:$0xff]
        %v316 = vld [vmem:[%s223 + $0x1c0] sm:$0xff]
        %v317 = vld [vmem:[%s223 + $0x1c8] sm:$0xff]
        %v318 = vld [vmem:[%s223 + $0x1d0] sm:$0xff]
        %v319 = vld [vmem:[%s223 + $0x1d8] sm:$0xff]
        %v320 = vld [vmem:[%s223 + $0x1e0] sm:$0xff]
        %v321 = vld [vmem:[%s223 + $0x1e8] sm:$0xff]
        %v322 = vld [vmem:[%s223 + $0x1f0] sm:$0xff]
        %v323 = vld [vmem:[%s223 + $0x1f8] sm:$0xff]
        %v324 = vld [vmem:[#allocation2] sm:$0xff]
        %v325 = vld [vmem:[%s205] sm:$0xf]
        %v328 = vunpack.c.l.s4 1983009808
        %v329 = vunpack.c.0.s8 %v328
        %v330 = vlaneseq
        %v331 = vshrl.u32 %v330, 7
        %v332 = vsub.s32 %v329, %v331
        %v333 = vrot.slane %v325, %v332
        %v334 = vcombine.high %v333, %v333
        %v337 = vpack.c.bf16 %v333, %v333
        %v338 = vpack.c.bf16 %v334, %v334
        %v403 = vunpack.c.l.b16 %v260
        %v404 = vunpack.c.h.b16 %v260
        %v405 = vunpack.c.l.b16 %v261
        %v406 = vunpack.c.h.b16 %v261
        %v407 = vunpack.c.l.b16 %v262
        %v408 = vunpack.c.h.b16 %v262
        %v409 = vunpack.c.l.b16 %v263
        %v410 = vunpack.c.h.b16 %v263
        %v411 = vunpack.c.l.b16 %v264
        %v412 = vunpack.c.h.b16 %v264
        %v413 = vunpack.c.l.b16 %v265
        %v414 = vunpack.c.h.b16 %v265
        %v415 = vunpack.c.l.b16 %v266
        %v416 = vunpack.c.h.b16 %v266
        %v417 = vunpack.c.l.b16 %v267
        %v418 = vunpack.c.h.b16 %v267
        %v419 = vunpack.c.l.b16 %v268
        %v420 = vunpack.c.h.b16 %v268
        %v421 = vunpack.c.l.b16 %v269
        %v422 = vunpack.c.h.b16 %v269
        %v423 = vunpack.c.l.b16 %v270
        %v424 = vunpack.c.h.b16 %v270
        %v425 = vunpack.c.l.b16 %v271
        %v426 = vunpack.c.h.b16 %v271
        %v427 = vunpack.c.l.b16 %v272
        %v428 = vunpack.c.h.b16 %v272
        %v429 = vunpack.c.l.b16 %v273
        %v430 = vunpack.c.h.b16 %v273
        %v431 = vunpack.c.l.b16 %v274
        %v432 = vunpack.c.h.b16 %v274
        %v433 = vunpack.c.l.b16 %v275
        %v434 = vunpack.c.h.b16 %v275
        %v435 = vunpack.c.l.b16 %v276
        %v436 = vunpack.c.h.b16 %v276
        %v437 = vunpack.c.l.b16 %v277
        %v438 = vunpack.c.h.b16 %v277
        %v439 = vunpack.c.l.b16 %v278
        %v440 = vunpack.c.h.b16 %v278
        %v441 = vunpack.c.l.b16 %v279
        %v442 = vunpack.c.h.b16 %v279
        %v443 = vunpack.c.l.b16 %v280
        %v444 = vunpack.c.h.b16 %v280
        %v445 = vunpack.c.l.b16 %v281
        %v446 = vunpack.c.h.b16 %v281
        %v447 = vunpack.c.l.b16 %v282
        %v448 = vunpack.c.h.b16 %v282
        %v449 = vunpack.c.l.b16 %v283
        %v450 = vunpack.c.h.b16 %v283
        %v451 = vunpack.c.l.b16 %v284
        %v452 = vunpack.c.h.b16 %v284
        %v453 = vunpack.c.l.b16 %v285
        %v454 = vunpack.c.h.b16 %v285
        %v455 = vunpack.c.l.b16 %v286
        %v456 = vunpack.c.h.b16 %v286
        %v457 = vunpack.c.l.b16 %v287
        %v458 = vunpack.c.h.b16 %v287
        %v459 = vunpack.c.l.b16 %v288
        %v460 = vunpack.c.h.b16 %v288
        %v461 = vunpack.c.l.b16 %v289
        %v462 = vunpack.c.h.b16 %v289
        %v463 = vunpack.c.l.b16 %v290
        %v464 = vunpack.c.h.b16 %v290
        %v465 = vunpack.c.l.b16 %v291
        %v466 = vunpack.c.h.b16 %v291
        %v467 = vunpack.c.l.b16 %v292
        %v468 = vunpack.c.h.b16 %v292
        %v469 = vunpack.c.l.b16 %v293
        %v470 = vunpack.c.h.b16 %v293
        %v471 = vunpack.c.l.b16 %v294
        %v472 = vunpack.c.h.b16 %v294
        %v473 = vunpack.c.l.b16 %v295
        %v474 = vunpack.c.h.b16 %v295
        %v475 = vunpack.c.l.b16 %v296
        %v476 = vunpack.c.h.b16 %v296
        %v477 = vunpack.c.l.b16 %v297
        %v478 = vunpack.c.h.b16 %v297
        %v479 = vunpack.c.l.b16 %v298
        %v480 = vunpack.c.h.b16 %v298
        %v481 = vunpack.c.l.b16 %v299
        %v482 = vunpack.c.h.b16 %v299
        %v483 = vunpack.c.l.b16 %v300
        %v484 = vunpack.c.h.b16 %v300
        %v485 = vunpack.c.l.b16 %v301
        %v486 = vunpack.c.h.b16 %v301
        %v487 = vunpack.c.l.b16 %v302
        %v488 = vunpack.c.h.b16 %v302
        %v489 = vunpack.c.l.b16 %v303
        %v490 = vunpack.c.h.b16 %v303
        %v491 = vunpack.c.l.b16 %v304
        %v492 = vunpack.c.h.b16 %v304
        %v493 = vunpack.c.l.b16 %v305
        %v494 = vunpack.c.h.b16 %v305
        %v495 = vunpack.c.l.b16 %v306
        %v496 = vunpack.c.h.b16 %v306
        %v497 = vunpack.c.l.b16 %v307
        %v498 = vunpack.c.h.b16 %v307
        %v499 = vunpack.c.l.b16 %v308
        %v500 = vunpack.c.h.b16 %v308
        %v501 = vunpack.c.l.b16 %v309
        %v502 = vunpack.c.h.b16 %v309
        %v503 = vunpack.c.l.b16 %v310
        %v504 = vunpack.c.h.b16 %v310
        %v505 = vunpack.c.l.b16 %v311
        %v506 = vunpack.c.h.b16 %v311
        %v507 = vunpack.c.l.b16 %v312
        %v508 = vunpack.c.h.b16 %v312
        %v509 = vunpack.c.l.b16 %v313
        %v510 = vunpack.c.h.b16 %v313
        %v511 = vunpack.c.l.b16 %v314
        %v512 = vunpack.c.h.b16 %v314
        %v513 = vunpack.c.l.b16 %v315
        %v514 = vunpack.c.h.b16 %v315
        %v515 = vunpack.c.l.b16 %v316
        %v516 = vunpack.c.h.b16 %v316
        %v517 = vunpack.c.l.b16 %v317
        %v518 = vunpack.c.h.b16 %v317
        %v519 = vunpack.c.l.b16 %v318
        %v520 = vunpack.c.h.b16 %v318
        %v521 = vunpack.c.l.b16 %v319
        %v522 = vunpack.c.h.b16 %v319
        %v523 = vunpack.c.l.b16 %v320
        %v524 = vunpack.c.h.b16 %v320
        %v525 = vunpack.c.l.b16 %v321
        %v526 = vunpack.c.h.b16 %v321
        %v527 = vunpack.c.l.b16 %v322
        %v528 = vunpack.c.h.b16 %v322
        %v529 = vunpack.c.l.b16 %v323
        %v530 = vunpack.c.h.b16 %v323
        %v531 = vpack.c.b16 %v407, %v403
        %v532 = vpack.c.b16 %v408, %v404
        %v533 = vpack.c.b16 %v409, %v405
        %v534 = vpack.c.b16 %v410, %v406
        %v535 = vpack.c.b16 %v415, %v411
        %v536 = vpack.c.b16 %v416, %v412
        %v537 = vpack.c.b16 %v417, %v413
        %v538 = vpack.c.b16 %v418, %v414
        %v539 = vpack.c.b16 %v423, %v419
        %v540 = vpack.c.b16 %v424, %v420
        %v541 = vpack.c.b16 %v425, %v421
        %v542 = vpack.c.b16 %v426, %v422
        %v543 = vpack.c.b16 %v431, %v427
        %v544 = vpack.c.b16 %v432, %v428
        %v545 = vpack.c.b16 %v433, %v429
        %v546 = vpack.c.b16 %v434, %v430
        %v547 = vpack.c.b16 %v439, %v435
        %v548 = vpack.c.b16 %v440, %v436
        %v549 = vpack.c.b16 %v441, %v437
        %v550 = vpack.c.b16 %v442, %v438
        %v551 = vpack.c.b16 %v447, %v443
        %v552 = vpack.c.b16 %v448, %v444
        %v553 = vpack.c.b16 %v449, %v445
        %v554 = vpack.c.b16 %v450, %v446
        %v555 = vpack.c.b16 %v455, %v451
        %v556 = vpack.c.b16 %v456, %v452
        %v557 = vpack.c.b16 %v457, %v453
        %v558 = vpack.c.b16 %v458, %v454
        %v559 = vpack.c.b16 %v463, %v459
        %v560 = vpack.c.b16 %v464, %v460
        %v561 = vpack.c.b16 %v465, %v461
        %v562 = vpack.c.b16 %v466, %v462
        %v563 = vpack.c.b16 %v471, %v467
        %v564 = vpack.c.b16 %v472, %v468
        %v565 = vpack.c.b16 %v473, %v469
        %v566 = vpack.c.b16 %v474, %v470
        %v567 = vpack.c.b16 %v479, %v475
        %v568 = vpack.c.b16 %v480, %v476
        %v569 = vpack.c.b16 %v481, %v477
        %v570 = vpack.c.b16 %v482, %v478
        %v571 = vpack.c.b16 %v487, %v483
        %v572 = vpack.c.b16 %v488, %v484
        %v573 = vpack.c.b16 %v489, %v485
        %v574 = vpack.c.b16 %v490, %v486
        %v575 = vpack.c.b16 %v495, %v491
        %v576 = vpack.c.b16 %v496, %v492
        %v577 = vpack.c.b16 %v497, %v493
        %v578 = vpack.c.b16 %v498, %v494
        %v579 = vpack.c.b16 %v503, %v499
        %v580 = vpack.c.b16 %v504, %v500
        %v581 = vpack.c.b16 %v505, %v501
        %v582 = vpack.c.b16 %v506, %v502
        %v583 = vpack.c.b16 %v511, %v507
        %v584 = vpack.c.b16 %v512, %v508
        %v585 = vpack.c.b16 %v513, %v509
        %v586 = vpack.c.b16 %v514, %v510
        %v587 = vpack.c.b16 %v519, %v515
        %v588 = vpack.c.b16 %v520, %v516
        %v589 = vpack.c.b16 %v521, %v517
        %v590 = vpack.c.b16 %v522, %v518
        %v591 = vpack.c.b16 %v527, %v523
        %v592 = vpack.c.b16 %v528, %v524
        %v593 = vpack.c.b16 %v529, %v525
        %v594 = vpack.c.b16 %v530, %v526
        %659 = vmatprep.subr.bf16.mxu0 %v560
        %660 = vmatpush1.bf16.msra.mxu0 %v559
        %661 = vmatprep.subr.bf16.mxu0 %v556
        %662 = vmatpush1.bf16.msra.mxu0 %v555
        %663 = vmatprep.subr.bf16.mxu0 %v552
        %664 = vmatpush1.bf16.msra.mxu0 %v551
        %665 = vmatprep.subr.bf16.mxu0 %v548
        %666 = vmatpush1.bf16.msra.mxu0 %v547
        %667 = vmatprep.subr.bf16.mxu0 %v544
        %668 = vmatpush1.bf16.msra.mxu0 %v543
        %669 = vmatprep.subr.bf16.mxu0 %v540
        %670 = vmatpush1.bf16.msra.mxu0 %v539
        %671 = vmatprep.subr.bf16.mxu0 %v536
        %672 = vmatpush1.bf16.msra.mxu0 %v535
        %673 = vmatprep.subr.bf16.mxu0 %v532
        %674 = vmatpush1.bf16.msra.mxu0 %v531
        %675 = vmatprep.subr.bf16.mxu0 %v592
        %676 = vmatpush2.bf16.msra.mxu0 %v591
        %677 = vmatprep.subr.bf16.mxu0 %v588
        %678 = vmatpush2.bf16.msra.mxu0 %v587
        %679 = vmatprep.subr.bf16.mxu0 %v584
        %680 = vmatpush2.bf16.msra.mxu0 %v583
        %681 = vmatprep.subr.bf16.mxu0 %v580
        %682 = vmatpush2.bf16.msra.mxu0 %v579
        %683 = vmatprep.subr.bf16.mxu0 %v576
        %684 = vmatpush2.bf16.msra.mxu0 %v575
        %685 = vmatprep.subr.bf16.mxu0 %v572
        %686 = vmatpush2.bf16.msra.mxu0 %v571
        %687 = vmatprep.subr.bf16.mxu0 %v568
        %688 = vmatpush2.bf16.msra.mxu0 %v567
        %689 = vmatprep.subr.bf16.mxu0 %v564
        %690 = vmatpush2.bf16.msra.mxu0 %v563
        %691 = vmatprep.mubr.bf16.mxu0 %v338
        %692 = vmatmul.mubr.bf16.gmra.mxu0 %v337
        %v693 = vpop.f32.mrf.mxu0
        %v694 = vadd.f32 0.0, %v693
        %v695 = vpop.f32.mrf.mxu0
        %v696 = vadd.f32 0.0, %v695
        %v697 = vpop.f32.mrf.mxu0
        %v698 = vpop.f32.mrf.mxu0
        %699 = vdwg.mxu0
        %700 = vmatprep.subr.bf16.mxu0 %v562
        %701 = vmatpush1.bf16.msra.mxu0 %v561
        %702 = vmatprep.subr.bf16.mxu0 %v558
        %703 = vmatpush1.bf16.msra.mxu0 %v557
        %704 = vmatprep.subr.bf16.mxu0 %v554
        %705 = vmatpush1.bf16.msra.mxu0 %v553
        %706 = vmatprep.subr.bf16.mxu0 %v550
        %707 = vmatpush1.bf16.msra.mxu0 %v549
        %708 = vmatprep.subr.bf16.mxu0 %v546
        %709 = vmatpush1.bf16.msra.mxu0 %v545
        %710 = vmatprep.subr.bf16.mxu0 %v542
        %711 = vmatpush1.bf16.msra.mxu0 %v541
        %712 = vmatprep.subr.bf16.mxu0 %v538
        %713 = vmatpush1.bf16.msra.mxu0 %v537
        %714 = vmatprep.subr.bf16.mxu0 %v534
        %715 = vmatpush1.bf16.msra.mxu0 %v533
        %716 = vmatprep.subr.bf16.mxu0 %v594
        %717 = vmatpush2.bf16.msra.mxu0 %v593
        %718 = vmatprep.subr.bf16.mxu0 %v590
        %719 = vmatpush2.bf16.msra.mxu0 %v589
        %720 = vmatprep.subr.bf16.mxu0 %v586
        %721 = vmatpush2.bf16.msra.mxu0 %v585
        %722 = vmatprep.subr.bf16.mxu0 %v582
        %723 = vmatpush2.bf16.msra.mxu0 %v581
        %724 = vmatprep.subr.bf16.mxu0 %v578
        %725 = vmatpush2.bf16.msra.mxu0 %v577
        %726 = vmatprep.subr.bf16.mxu0 %v574
        %727 = vmatpush2.bf16.msra.mxu0 %v573
        %728 = vmatprep.subr.bf16.mxu0 %v570
        %729 = vmatpush2.bf16.msra.mxu0 %v569
        %730 = vmatprep.subr.bf16.mxu0 %v566
        %731 = vmatpush2.bf16.msra.mxu0 %v565
        %732 = vmatprep.mubr.bf16.mxu0 %v338
        %733 = vmatmul.mubr.bf16.gmra.mxu0 %v337
        %v734 = vpop.f32.mrf.mxu0
        %v735 = vadd.f32 0.0, %v734
        %v736 = vpop.f32.mrf.mxu0
        %v737 = vadd.f32 0.0, %v736
        %v738 = vpop.f32.mrf.mxu0
        %v739 = vpop.f32.mrf.mxu0
        %740 = vdwg.mxu0
        %v745 = vcombine.low %v694, %v696
        %v746 = vcombine.low %v735, %v737
        %v748 = vunpack.c.l.s4 1983009808
        %v749 = vunpack.c.0.s8 %v748
        %v750 = vlaneseq
        %v751 = vshrl.u32 %v750, 7
        %v752 = vsub.s32 %v749, %v751
        %v753 = vrot.slane %v745, %v752
        %v755 = vunpack.c.l.s4 1983009808
        %v756 = vunpack.c.0.s8 %v755
        %v757 = vlaneseq
        %v758 = vshrl.u32 %v757, 7
        %v759 = vsub.s32 %v756, %v758
        %v760 = vrot.slane %v746, %v759
        %v761 = vcombine.low %v753, %v760
        %v763 = vadd.f32 %v324, %v761
        %764 = vst [vmem:[#allocation2] sm:$0xff] %v763
        %v765 = vld [vmem:[#allocation3] sm:$0xff]
        %v766 = vld [vmem:[%s214] sm:$0xf]
        %v769 = vunpack.c.l.s4 1983009808
        %v770 = vunpack.c.0.s8 %v769
        %v771 = vlaneseq
        %v772 = vshrl.u32 %v771, 7
        %v773 = vsub.s32 %v770, %v772
        %v774 = vrot.slane %v766, %v773
        %v775 = vcombine.high %v774, %v774
        %v778 = vpack.c.bf16 %v774, %v774
        %v779 = vpack.c.bf16 %v775, %v775
        %780 = vmatprep.subr.bf16.mxu0 %v560
        %781 = vmatpush1.bf16.msra.mxu0 %v559
        %782 = vmatprep.subr.bf16.mxu0 %v556
        %783 = vmatpush1.bf16.msra.mxu0 %v555
        %784 = vmatprep.subr.bf16.mxu0 %v552
        %785 = vmatpush1.bf16.msra.mxu0 %v551
        %786 = vmatprep.subr.bf16.mxu0 %v548
        %787 = vmatpush1.bf16.msra.mxu0 %v547
        %788 = vmatprep.subr.bf16.mxu0 %v544
        %789 = vmatpush1.bf16.msra.mxu0 %v543
        %790 = vmatprep.subr.bf16.mxu0 %v540
        %791 = vmatpush1.bf16.msra.mxu0 %v539
        %792 = vmatprep.subr.bf16.mxu0 %v536
        %793 = vmatpush1.bf16.msra.mxu0 %v535
        %794 = vmatprep.subr.bf16.mxu0 %v532
        %795 = vmatpush1.bf16.msra.mxu0 %v531
        %796 = vmatprep.subr.bf16.mxu0 %v592
        %797 = vmatpush2.bf16.msra.mxu0 %v591
        %798 = vmatprep.subr.bf16.mxu0 %v588
        %799 = vmatpush2.bf16.msra.mxu0 %v587
        %800 = vmatprep.subr.bf16.mxu0 %v584
        %801 = vmatpush2.bf16.msra.mxu0 %v583
        %802 = vmatprep.subr.bf16.mxu0 %v580
        %803 = vmatpush2.bf16.msra.mxu0 %v579
        %804 = vmatprep.subr.bf16.mxu0 %v576
        %805 = vmatpush2.bf16.msra.mxu0 %v575
        %806 = vmatprep.subr.bf16.mxu0 %v572
        %807 = vmatpush2.bf16.msra.mxu0 %v571
        %808 = vmatprep.subr.bf16.mxu0 %v568
        %809 = vmatpush2.bf16.msra.mxu0 %v567
        %810 = vmatprep.subr.bf16.mxu0 %v564
        %811 = vmatpush2.bf16.msra.mxu0 %v563
        %812 = vmatprep.mubr.bf16.mxu0 %v779
        %813 = vmatmul.mubr.bf16.gmra.mxu0 %v778
        %v814 = vpop.f32.mrf.mxu0
        %v815 = vadd.f32 0.0, %v814
        %v816 = vpop.f32.mrf.mxu0
        %v817 = vadd.f32 0.0, %v816
        %v818 = vpop.f32.mrf.mxu0
        %v819 = vpop.f32.mrf.mxu0
        %820 = vdwg.mxu0
        %821 = vmatprep.subr.bf16.mxu0 %v562
        %822 = vmatpush1.bf16.msra.mxu0 %v561
        %823 = vmatprep.subr.bf16.mxu0 %v558
        %824 = vmatpush1.bf16.msra.mxu0 %v557
        %825 = vmatprep.subr.bf16.mxu0 %v554
        %826 = vmatpush1.bf16.msra.mxu0 %v553
        %827 = vmatprep.subr.bf16.mxu0 %v550
        %828 = vmatpush1.bf16.msra.mxu0 %v549
        %829 = vmatprep.subr.bf16.mxu0 %v546
        %830 = vmatpush1.bf16.msra.mxu0 %v545
        %831 = vmatprep.subr.bf16.mxu0 %v542
        %832 = vmatpush1.bf16.msra.mxu0 %v541
        %833 = vmatprep.subr.bf16.mxu0 %v538
        %834 = vmatpush1.bf16.msra.mxu0 %v537
        %835 = vmatprep.subr.bf16.mxu0 %v534
        %836 = vmatpush1.bf16.msra.mxu0 %v533
        %837 = vmatprep.subr.bf16.mxu0 %v594
        %838 = vmatpush2.bf16.msra.mxu0 %v593
        %839 = vmatprep.subr.bf16.mxu0 %v590
        %840 = vmatpush2.bf16.msra.mxu0 %v589
        %841 = vmatprep.subr.bf16.mxu0 %v586
        %842 = vmatpush2.bf16.msra.mxu0 %v585
        %843 = vmatprep.subr.bf16.mxu0 %v582
        %844 = vmatpush2.bf16.msra.mxu0 %v581
        %845 = vmatprep.subr.bf16.mxu0 %v578
        %846 = vmatpush2.bf16.msra.mxu0 %v577
        %847 = vmatprep.subr.bf16.mxu0 %v574
        %848 = vmatpush2.bf16.msra.mxu0 %v573
        %849 = vmatprep.subr.bf16.mxu0 %v570
        %850 = vmatpush2.bf16.msra.mxu0 %v569
        %851 = vmatprep.subr.bf16.mxu0 %v566
        %852 = vmatpush2.bf16.msra.mxu0 %v565
        %853 = vmatprep.mubr.bf16.mxu0 %v779
        %854 = vmatmul.mubr.bf16.gmra.mxu0 %v778
        %v855 = vpop.f32.mrf.mxu0
        %v856 = vadd.f32 0.0, %v855
        %v857 = vpop.f32.mrf.mxu0
        %v858 = vadd.f32 0.0, %v857
        %v859 = vpop.f32.mrf.mxu0
        %v860 = vpop.f32.mrf.mxu0
        %861 = vdwg.mxu0
        %v866 = vcombine.low %v815, %v817
        %v867 = vcombine.low %v856, %v858
        %v869 = vunpack.c.l.s4 1983009808
        %v870 = vunpack.c.0.s8 %v869
        %v871 = vlaneseq
        %v872 = vshrl.u32 %v871, 7
        %v873 = vsub.s32 %v870, %v872
        %v874 = vrot.slane %v866, %v873
        %v876 = vunpack.c.l.s4 1983009808
        %v877 = vunpack.c.0.s8 %v876
        %v878 = vlaneseq
        %v879 = vshrl.u32 %v878, 7
        %v880 = vsub.s32 %v877, %v879
        %v881 = vrot.slane %v867, %v880
        %v882 = vcombine.low %v874, %v881
        %v884 = vadd.f32 %v765, %v882
        %885 = vst [vmem:[#allocation3] sm:$0xff] %v884
        %p886 = scmp.eq.s32.totalorder %s21, 2
        // Predicated region
        $region49: #{tpu_custom_call.1} parent=31 // pred_check
          %p887 = pneg %p886
        $region50: #{tpu_custom_call.1} parent=31 // pred_check_branch
          %889 = sbr.rel (%p887) target = $region52
        $region51: #{tpu_custom_call.1} parent=31 // pred_region
          %v890 = vld [vmem:[#allocation2] sm:$0xff]
          %v891 = vld [vmem:[#allocation3] sm:$0xff]
          %v892 = vmul.f32 %v890, %v891
          %v894 = vcombine.high %v892, %v892
          %v896 = vunpack.c.l.s4 1983009808
          %v897 = vunpack.c.0.s8 %v896
          %v898 = vlaneseq
          %v899 = vshrl.u32 %v898, 7
          %v900 = vsub.s32 %v897, %v899
          %v901 = vrot.slane %v892, %v900
          %v903 = vunpack.c.l.s4 1983009808
          %v904 = vunpack.c.0.s8 %v903
          %v905 = vlaneseq
          %v906 = vshrl.u32 %v905, 7
          %v907 = vsub.s32 %v904, %v906
          %v908 = vrot.slane %v894, %v907
          %v909 = vcombine.high %v901, %v901
          %v910 = vcombine.high %v908, %v908
          %vm915 = vcmask 1041408
          %v916 = vsel %vm915, %v901, 0.0
          %v917 = vsel %vm915, %v909, 0.0
          %v918 = vadd.f32 %v916, %v917
          %v919 = vsel %vm915, %v908, 0.0
          %v920 = vadd.f32 %v918, %v919
          %v921 = vsel %vm915, %v910, 0.0
          %v922 = vadd.f32 %v920, %v921
          %923 = vadd.xlane.f32.xlu0 %v922
          %v924 = vpop.xlane.xlu0 %923
          %v925 = vmul.f32 %v890, %v890
          %v927 = vcombine.high %v925, %v925
          %v929 = vunpack.c.l.s4 1983009808
          %v930 = vunpack.c.0.s8 %v929
          %v931 = vlaneseq
          %v932 = vshrl.u32 %v931, 7
          %v933 = vsub.s32 %v930, %v932
          %v934 = vrot.slane %v925, %v933
          %v936 = vunpack.c.l.s4 1983009808
          %v937 = vunpack.c.0.s8 %v936
          %v938 = vlaneseq
          %v939 = vshrl.u32 %v938, 7
          %v940 = vsub.s32 %v937, %v939
          %v941 = vrot.slane %v927, %v940
          %v942 = vcombine.high %v934, %v934
          %v943 = vcombine.high %v941, %v941
          %v948 = vsel %vm915, %v934, 0.0
          %v949 = vsel %vm915, %v942, 0.0
          %v950 = vadd.f32 %v948, %v949
          %v951 = vsel %vm915, %v941, 0.0
          %v952 = vadd.f32 %v950, %v951
          %v953 = vsel %vm915, %v943, 0.0
          %v954 = vadd.f32 %v952, %v953
          %955 = vadd.xlane.f32.xlu0 %v954
          %v956 = vpop.xlane.xlu0 %955
          %v957 = vadd.f32 %v956, 1e-12
          %v958 = vmul.f32 %v891, %v891
          %v960 = vcombine.high %v958, %v958
          %v962 = vunpack.c.l.s4 1983009808
          %v963 = vunpack.c.0.s8 %v962
          %v964 = vlaneseq
          %v965 = vshrl.u32 %v964, 7
          %v966 = vsub.s32 %v963, %v965
          %v967 = vrot.slane %v958, %v966
          %v969 = vunpack.c.l.s4 1983009808
          %v970 = vunpack.c.0.s8 %v969
          %v971 = vlaneseq
          %v972 = vshrl.u32 %v971, 7
          %v973 = vsub.s32 %v970, %v972
          %v974 = vrot.slane %v960, %v973
          %v975 = vcombine.high %v967, %v967
          %v976 = vcombine.high %v974, %v974
          %v981 = vsel %vm915, %v967, 0.0
          %v982 = vsel %vm915, %v975, 0.0
          %v983 = vadd.f32 %v981, %v982
          %v984 = vsel %vm915, %v974, 0.0
          %v985 = vadd.f32 %v983, %v984
          %v986 = vsel %vm915, %v976, 0.0
          %v987 = vadd.f32 %v985, %v986
          %988 = vadd.xlane.f32.xlu0 %v987
          %v989 = vpop.xlane.xlu0 %988
          %v990 = vadd.f32 %v989, 1e-12
          %v991 = vmul.f32 %v957, %v990
          %v992 = vrsqrt.pop %v991
          %v993 = vmul.f32 %v924, %v992
          %v994 = vsub.f32 1.0, %v993
          %v995 = vsel %vm915, %v994, 0.0
          %v996 = vrot.slane %v995, 4
          %v997 = vadd.f32 %v995, %v996
          %v998 = vrot.slane %v997, 2
          %v999 = vadd.f32 %v997, %v998
          %v1000 = vrot.slane %v999, 1
          %v1001 = vadd.f32 %v999, %v1000
          %v1002 = vmul.f32 %v1001, 0.5
          %vm1003 = vcmask 0
          %1004 = vst.msk [vmem:[#allocation10] sm:$0x1] %vm1003, %v1002
        $region52: #{tpu_custom_call.1} parent=31 // pred_fallthru
          _
        // Predicated region
        $region53: #{tpu_custom_call.1} parent=31 // pred_check
          %p1005 = pneg %p112
        $region54: #{tpu_custom_call.1} parent=31 // pred_check_branch
          %1007 = sbr.rel (%p1005) target = $region56
        $region55: #{tpu_custom_call.1} parent=31 // pred_region
          %s1009 = ssub.s32 16, 16
          %1010 = vsyncadd [#allocation6], %s1009
          %s1012 = sshll.u32 [#allocation10], 4
          %s1013 = int_to_ptr.vmem [resolvable:$true] %s1012
          %1015 = dma.vmem_to_hbm [thread:$0]  %s1013, 16, %s3, [#allocation6]
        $region56: #{tpu_custom_call.1} parent=31 // pred_fallthru
          _
        // Predicated region
        $region57: #{tpu_custom_call.1} parent=31 // pred_check
          %p1016 = pneg %p112
        $region58: #{tpu_custom_call.1} parent=31 // pred_check_branch
          %1018 = sbr.rel (%p1016) target = $region60
        $region59: #{tpu_custom_call.1} parent=31 // pred_region
          %1019 = dma.done [#allocation6], 16
        $region60: #{tpu_custom_call.1} parent=31 // pred_fallthru
          _
      $region32: #{tpu_custom_call.1} parent=5 // pred_fallthru
        _
      %p1020 = scmp.le.s32.totalorder 2, %s16
      // Predicated region
      $region61: #{tpu_custom_call.1} parent=5 // pred_check
        %p1021 = pneg %p1020
      $region62: #{tpu_custom_call.1} parent=5 // pred_check_branch
        %1023 = sbr.rel (%p1021) target = $region64
      $region63: #{tpu_custom_call.1} parent=5 // pred_region
        %s1024 = ssub.s32 %s16, 2
      $region64: #{tpu_custom_call.1} parent=5 // pred_fallthru
        _
    $region6: #{tpu_custom_call.1} parent=1 // loop_footer
      %s20 = sadd.s32 1, %s16
    $region7: #{tpu_custom_call.1} parent=1 // loop_footer_branch
      %15 = sbr.rel target = $region3
    $region8: #{tpu_custom_call.1} parent=1 // loop_exit
      _
    %1025 = vsyncpa [#allocation5], 1
    %s1026 = scalar_lea.sflag [#allocation5], 1
    %1027 = vsyncpa %s1026, 1
    %1028 = vsyncpa [#allocation8], 1
    %s1029 = scalar_lea.sflag [#allocation8], 1
    %1030 = vsyncpa %s1029, 1
    %1031 = vsyncpa [#allocation6], 1
    %s1032 = scalar_lea.sflag [#allocation6], 1
    %1033 = vsyncpa %s1032, 1

</llo_original>
